<compile_context>
chip_gen: v7x
topology: tpu7x:2x2x1
jax: 0.10.0
libtpu: 0.0.40
codegen_flags: <defaults>
</compile_context>

<pallas_src>
import jax
import jax.numpy as jnp
from jax.experimental import pallas as pl
from jax.experimental.pallas import tpu as pltpu


def _self_attention_kernel(q_ref, kt_ref, v_ref, w_ref, b_ref, o_ref):
    """One grid step = Bn batch elements (heads == 1 -> head_dim == embed_size).

    q_ref:  (Bn, Lq, E)  bf16, already scaled by 1/sqrt(E)
    kt_ref: (Bn, E, Lk)  bf16, keys pre-transposed
    v_ref:  (Bn, Lk, E)  bf16
    w_ref:  (E, E)       bf16 fc weight, pre-transposed to (in, out)
    b_ref:  (1, E)       f32 fc bias
    o_ref:  (Bn, Lq, E)  f32
    """
    q = q_ref[...]
    kt = kt_ref[...]
    v = v_ref[...]

    # energy[b, q, k] = sum_d q_scaled[b, q, d] * k[b, k, d]   (MXU, f32 acc)
    energy = jnp.einsum('bqd,bdk->bqk', q, kt,
                        preferred_element_type=jnp.float32)        # (Bn, Lq, Lk)

    # Numerically stable softmax over the key axis; normalization deferred.
    m = jnp.max(energy, axis=-1, keepdims=True)
    p = jnp.exp(energy - m)                                        # f32
    denom = jnp.sum(p, axis=-1, keepdims=True)                     # (Bn, Lq, 1)

    # Unnormalized context (MXU), then rescale by 1/denom (EUP reciprocal).
    ctx = jnp.einsum('bqk,bkd->bqd', p.astype(v.dtype), v,
                     preferred_element_type=jnp.float32)           # (Bn, Lq, E)
    ctx = ctx * pl.reciprocal(denom, approx=True)

    # fully_connected_out: flatten (Bn, Lq) into the sublane axis so the fc is
    # one big (Bn*Lq, E) @ (E, E) MXU matmul.
    bn, lq, e_out = o_ref.shape
    y = jnp.dot(ctx.reshape(bn * lq, -1).astype(w_ref.dtype), w_ref[...],
                preferred_element_type=jnp.float32)
    y = y + b_ref[...]                                             # f32 bias add
    o_ref[...] = y.reshape(bn, lq, e_out).astype(o_ref.dtype)


def self_attention_forward(values, keys, query, mask, fc_weight, fc_bias,
                           *, embed_size, heads, block_n=8):
    """Pallas forward matching SelfAttention.forward(values, keys, query, mask)."""
    assert mask is None, "only the mask=None path of the reference is supported"
    assert embed_size % heads == 0
    head_dim = embed_size // heads
    assert heads == 1 and head_dim == embed_size, (
        "reference forward is only well-defined for heads == 1 (see notes above)")

    N, Lq, E = query.shape
    Lk = keys.shape[1]
    Lv = values.shape[1]
    assert E == embed_size and keys.shape[2] == E and values.shape[2] == E
    assert Lk == Lv

    # Wrapper-side prep (fused into the producing ops by XLA):
    scale = 1.0 / (float(embed_size) ** 0.5)
    q_s = (jnp.asarray(query, jnp.float32) * scale).astype(jnp.bfloat16)   # (N, Lq, E)
    k_t = jnp.swapaxes(jnp.asarray(keys, jnp.float32), 1, 2).astype(jnp.bfloat16)  # (N, E, Lk)
    v_b = jnp.asarray(values, jnp.float32).astype(jnp.bfloat16)            # (N, Lk, E)
    w_t = jnp.asarray(fc_weight, jnp.float32).T.astype(jnp.bfloat16)       # (E_in, E_out)
    b2d = jnp.asarray(fc_bias, jnp.float32).reshape(1, E)                  # (1, E)

    # Largest batch chunk <= block_n that divides N (amortizes per-step cost,
    # fills the MXU with Bn*Lq rows, gives megacore parallel iterations).
    bn = max(d for d in range(1, min(block_n, N) + 1) if N % d == 0)

    out = pl.pallas_call(
        _self_attention_kernel,
        out_shape=jax.ShapeDtypeStruct((N, Lq, E), jnp.float32),
        grid=(N // bn,),
        in_specs=[
            pl.BlockSpec((bn, Lq, E), lambda n: (n, 0, 0)),   # q (pre-scaled, bf16)
            pl.BlockSpec((bn, E, Lk), lambda n: (n, 0, 0)),   # keys^T (bf16)
            pl.BlockSpec((bn, Lk, E), lambda n: (n, 0, 0)),   # values (bf16)
            pl.BlockSpec((E, E), lambda n: (0, 0)),           # fc weight (in, out)
            pl.BlockSpec((1, E), lambda n: (0, 0)),           # fc bias (f32)
        ],
        out_specs=pl.BlockSpec((bn, Lq, E), lambda n: (n, 0, 0)),
        compiler_params=pltpu.CompilerParams(dimension_semantics=("parallel",)),
    )(q_s, k_t, v_b, w_t, b2d)

    # PyTorch returns shape (N, Q, heads, embed_size) because the reshape
    # before the fc layer is discarded in the reference.
    return out.reshape(N, Lq, heads, E).astype(query.dtype)


def _reference_forward(values, keys, query, fc_weight, fc_bias, *, embed_size, heads):
    """Pure-JAX f32 transcription of the PyTorch forward (heads == 1 case)."""
    N, Lq, _ = query.shape
    hd = embed_size // heads
    v = values.reshape(N, -1, heads, hd)
    k = keys.reshape(N, -1, heads, hd)
    q = query.reshape(N, Lq, heads, hd)
    energy = jnp.einsum('nqhd,nkhd->nhqk', q, k)
    attn = jax.nn.softmax(energy / (embed_size ** 0.5), axis=3)
    out = jnp.einsum('nhqk,nkhd->nqhd', attn, v)          # (N, Q, H, hd)
    return out @ fc_weight.T + fc_bias                     # fc on last dim


if __name__ == "__main__":
    embed_size, heads = 32, 1
    N, L = 4, 8

    key = jax.random.PRNGKey(0)
    k1, k2, k3, k4, k5 = jax.random.split(key, 5)
    values = jax.random.normal(k1, (N, L, embed_size), jnp.float32)
    keys_ = jax.random.normal(k2, (N, L, embed_size), jnp.float32)
    query = jax.random.normal(k3, (N, L, embed_size), jnp.float32)
    # Deterministic fc parameters (Linear(heads*head_dim, embed_size)).
    fc_weight = 0.1 * jax.random.normal(
        k4, (embed_size, heads * (embed_size // heads)), jnp.float32)
    fc_bias = 0.1 * jax.random.normal(k5, (embed_size,), jnp.float32)

    # block_n=2 -> 2 batch elements per grid step, 2 grid steps (exercises both
    # the per-step batching and the grid tiling).
    out = self_attention_forward(values, keys_, query, None, fc_weight, fc_bias,
                                 embed_size=embed_size, heads=heads, block_n=2)
    out = jax.block_until_ready(out)

    ref = _reference_forward(values, keys_, query, fc_weight, fc_bias,
                             embed_size=embed_size, heads=heads)
    assert out.shape == (N, L, heads, embed_size), out.shape
    # bf16 MXU operands (f32 accumulation) + approx reciprocal -> compare
    # against the pure-f32 reference with a correspondingly loosened tolerance.
    err = float(jnp.max(jnp.abs(out - ref)))
    assert jnp.allclose(out, ref, atol=5e-2, rtol=5e-2), err

    print("KERNEL_OK")
</pallas_src>

<mosaic_0001>
module attributes {stable_mosaic.version = 11 : i64} {
  func.func @_self_attention_kernel(%arg0: i32, %arg1: memref<2x8x32xbf16, #tpu.memory_space<vmem>>, %arg2: memref<2x32x8xbf16, #tpu.memory_space<vmem>>, %arg3: memref<2x8x32xbf16, #tpu.memory_space<vmem>>, %arg4: memref<32x32xbf16, #tpu.memory_space<vmem>>, %arg5: memref<1x32xf32, #tpu.memory_space<vmem>>, %arg6: memref<2x8x32xf32, #tpu.memory_space<vmem>>) attributes {dimension_semantics = [#tpu.dimension_semantics<parallel>], iteration_bounds = array<i64: 2>, scalar_prefetch = 0 : i64, scratch_operands = 0 : i64, tpu.core_type = #tpu.core_type<tc>, window_params = [{transform_indices = @transform_0, window_bounds = array<i64: 2, 8, 32>}, {transform_indices = @transform_1, window_bounds = array<i64: 2, 32, 8>}, {transform_indices = @transform_2, window_bounds = array<i64: 2, 8, 32>}, {pipeline_mode = #tpu.pipeline_mode<synchronous>, transform_indices = @transform_3, window_bounds = array<i64: 32, 32>}, {pipeline_mode = #tpu.pipeline_mode<synchronous>, transform_indices = @transform_4, window_bounds = array<i64: 1, 32>}, {transform_indices = @transform_5, window_bounds = array<i64: 2, 8, 32>}]} {
    %c0 = arith.constant 0 : index
    %c0_0 = arith.constant 0 : index
    %c0_1 = arith.constant 0 : index
    %0 = vector.load %arg1[%c0, %c0_0, %c0_1] : memref<2x8x32xbf16, #tpu.memory_space<vmem>>, vector<2x8x32xbf16>
    %c0_2 = arith.constant 0 : index
    %c0_3 = arith.constant 0 : index
    %c0_4 = arith.constant 0 : index
    %1 = vector.load %arg2[%c0_2, %c0_3, %c0_4] : memref<2x32x8xbf16, #tpu.memory_space<vmem>>, vector<2x32x8xbf16>
    %c0_5 = arith.constant 0 : index
    %c0_6 = arith.constant 0 : index
    %c0_7 = arith.constant 0 : index
    %2 = vector.load %arg3[%c0_5, %c0_6, %c0_7] : memref<2x8x32xbf16, #tpu.memory_space<vmem>>, vector<2x8x32xbf16>
    "tpu.trace_start"() <{level = 10 : i32, message = "bqd,bdk->bqk"}> : () -> ()
    %cst = arith.constant dense<0.000000e+00> : vector<2x8x8xf32>
    %3 = tpu.matmul %0, %1, %cst {dimension_numbers = #tpu.dot_dimension_numbers<[2], [1], [1], [2], [0, 0, 0, 1, 1, 2], [0], [0]>} : vector<2x8x32xbf16>, vector<2x32x8xbf16>, vector<2x8x8xf32> -> vector<2x8x8xf32>
    "tpu.trace_stop"() : () -> ()
    %cst_8 = arith.constant dense<0xFF800000> : vector<2x8xf32>
    %4 = vector.multi_reduction <maximumf>, %3, %cst_8 [2] : vector<2x8x8xf32> to vector<2x8xf32>
    %5 = vector.shape_cast %4 : vector<2x8xf32> to vector<2x8x1xf32>
    %6 = vector.broadcast %5 : vector<2x8x1xf32> to vector<2x8x8xf32>
    %7 = arith.subf %3, %6 : vector<2x8x8xf32>
    %8 = math.exp %7 : vector<2x8x8xf32>
    %cst_9 = arith.constant dense<0.000000e+00> : vector<2x8xf32>
    %9 = vector.multi_reduction <add>, %8, %cst_9 [2] : vector<2x8x8xf32> to vector<2x8xf32>
    %10 = vector.shape_cast %9 : vector<2x8xf32> to vector<2x8x1xf32>
    %11 = arith.truncf %8 : vector<2x8x8xf32> to vector<2x8x8xbf16>
    "tpu.trace_start"() <{level = 10 : i32, message = "bqk,bkd->bqd"}> : () -> ()
    %cst_10 = arith.constant dense<0.000000e+00> : vector<2x8x32xf32>
    %12 = tpu.matmul %11, %2, %cst_10 {dimension_numbers = #tpu.dot_dimension_numbers<[2], [1], [1], [2], [0, 0, 0, 1, 1, 2], [0], [0]>} : vector<2x8x8xbf16>, vector<2x8x32xbf16>, vector<2x8x32xf32> -> vector<2x8x32xf32>
    "tpu.trace_stop"() : () -> ()
    %13 = tpu.reciprocal %10 {approx = true} : vector<2x8x1xf32> -> vector<2x8x1xf32>
    %14 = vector.broadcast %13 : vector<2x8x1xf32> to vector<2x8x32xf32>
    %15 = arith.mulf %12, %14 : vector<2x8x32xf32>
    %16 = vector.shape_cast %15 : vector<2x8x32xf32> to vector<16x32xf32>
    %17 = arith.truncf %16 : vector<16x32xf32> to vector<16x32xbf16>
    %c0_11 = arith.constant 0 : index
    %c0_12 = arith.constant 0 : index
    %18 = vector.load %arg4[%c0_11, %c0_12] : memref<32x32xbf16, #tpu.memory_space<vmem>>, vector<32x32xbf16>
    %cst_13 = arith.constant dense<0.000000e+00> : vector<16x32xf32>
    %19 = tpu.matmul %17, %18, %cst_13 {dimension_numbers = #tpu.dot_dimension_numbers<[1], [0], [0], [1], [0, 0, 1, 1], [], []>} : vector<16x32xbf16>, vector<32x32xbf16>, vector<16x32xf32> -> vector<16x32xf32>
    %c0_14 = arith.constant 0 : index
    %c0_15 = arith.constant 0 : index
    %20 = vector.load %arg5[%c0_14, %c0_15] : memref<1x32xf32, #tpu.memory_space<vmem>>, vector<1x32xf32>
    %21 = vector.broadcast %20 : vector<1x32xf32> to vector<16x32xf32>
    %22 = arith.addf %19, %21 : vector<16x32xf32>
    %23 = vector.shape_cast %22 : vector<16x32xf32> to vector<2x8x32xf32>
    %c0_16 = arith.constant 0 : index
    %c0_17 = arith.constant 0 : index
    %c0_18 = arith.constant 0 : index
    %24 = vector.load %arg6[%c0_16, %c0_17, %c0_18] : memref<2x8x32xf32, #tpu.memory_space<vmem>>, vector<2x8x32xf32>
    tpu.vector_store %arg6[%c0_16, %c0_17, %c0_18], %23 {strides = array<i32>} : memref<2x8x32xf32, #tpu.memory_space<vmem>>, vector<2x8x32xf32>,
    return
  }
  func.func @transform_0(%arg0: i32) -> (i32, i32, i32) {
    %c0_i32 = arith.constant 0 : i32
    %c0_i32_0 = arith.constant 0 : i32
    %c0_i32_1 = arith.constant 0 : i32
    return %arg0, %c0_i32, %c0_i32_0 : i32, i32, i32
  }
  func.func @transform_1(%arg0: i32) -> (i32, i32, i32) {
    %c0_i32 = arith.constant 0 : i32
    %c0_i32_0 = arith.constant 0 : i32
    %c0_i32_1 = arith.constant 0 : i32
    return %arg0, %c0_i32, %c0_i32_0 : i32, i32, i32
  }
  func.func @transform_2(%arg0: i32) -> (i32, i32, i32) {
    %c0_i32 = arith.constant 0 : i32
    %c0_i32_0 = arith.constant 0 : i32
    %c0_i32_1 = arith.constant 0 : i32
    return %arg0, %c0_i32, %c0_i32_0 : i32, i32, i32
  }
  func.func @transform_3(%arg0: i32) -> (i32, i32) {
    %c0_i32 = arith.constant 0 : i32
    %c0_i32_0 = arith.constant 0 : i32
    %c0_i32_1 = arith.constant 0 : i32
    return %c0_i32, %c0_i32_0 : i32, i32
  }
  func.func @transform_4(%arg0: i32) -> (i32, i32) {
    %c0_i32 = arith.constant 0 : i32
    %c0_i32_0 = arith.constant 0 : i32
    %c0_i32_1 = arith.constant 0 : i32
    return %c0_i32, %c0_i32_0 : i32, i32
  }
  func.func @transform_5(%arg0: i32) -> (i32, i32, i32) {
    %c0_i32 = arith.constant 0 : i32
    %c0_i32_0 = arith.constant 0 : i32
    %c0_i32_1 = arith.constant 0 : i32
    return %arg0, %c0_i32, %c0_i32_0 : i32, i32, i32
  }
}

</mosaic_0001>

<llo_original>
// kernel: tpu_custom_call.1
$region0: #{tpu_custom_call.1}
  #allocation0 [shape = 'u32[]', space=smem, size = 0x4, offset = 0x4, fixed_abs, tag = 'smem constant byte address 0x4 - core index']
  #allocation1 [shape = 'u32[144,128]{1,0:T(1,128)}', space=vmem, size = 0x12000, scoped, tag = 'internal scratch']
  %s0 = inlined_call_operand.vmem [shape: bf16[4,8,32], index: 0, kind: input, shape index: {}]
  %s1 = inlined_call_operand.vmem [shape: bf16[4,32,8], index: 1, kind: input, shape index: {}]
  %s2 = inlined_call_operand.vmem [shape: bf16[4,8,32], index: 2, kind: input, shape index: {}]
  %s3 = inlined_call_operand.vmem [shape: bf16[32,32], index: 3, kind: input, shape index: {}]
  %s4 = inlined_call_operand.vmem [shape: f32[1,32], index: 4, kind: input, shape index: {}]
  %s5 = inlined_call_operand.hbm [shape: f32[4,8,32], index: 5, kind: output, shape index: {}]
  %s6 = sld [smem:[#allocation0]]
  $region53: #{tpu_custom_call.1} parent=0
    _
  %s8 = ssub.s32 1, %s6
  %s9 = scalar_select 0, %s8, %s6
  $region1: #{tpu_custom_call.1} parent=0
    #allocation2 [shape = 'u8[16384]{0}', space=vmem, size = 0x4000, scoped, tag = 'output window, operand 0']
    #allocation3 [shape = 's32[2]{0}', space=sflag, size = 0x8, scoped, tag = 'scoped memory for tpu_custom_call.1']
    %10 = vsyncpa [#allocation3], 0
    %s11 = scalar_lea.sflag [#allocation3], 1
    %12 = vsyncpa %s11, 0
    loop: start=0, step=1, limit=4
    $region2: #{tpu_custom_call.1} parent=1 // loop_pre_header
      _
    $region3: #{tpu_custom_call.1} parent=1 // loop_header
      %s14 = sphi 0, %s18
      %p15 = scmp.ge.s32.totalorder %s14, 4
      %s24 = sphi 0, %s26
      %s27 = sphi 0, %s24
      %s28 = sphi 0, %s27
      %s44 = sphi 0, %s28
      %s50 = sphi 0, %s52
      %s53 = sphi 0, %s50
      %s54 = sphi 0, %s53
      %s70 = sphi 0, %s54
      %s76 = sphi 0, %s78
      %s79 = sphi 0, %s76
      %s80 = sphi 0, %s79
      %s96 = sphi 0, %s80
      %s100 = sphi 0, %s100
      %s102 = sphi 0, %s100
      %s103 = sphi 0, %s102
      %s117 = sphi 0, %s103
      %s121 = sphi 0, %s121
      %s123 = sphi 0, %s121
      %s124 = sphi 0, %s123
      %s138 = sphi 0, %s124
      %s144 = sphi 0, %s146
      %s147 = sphi 0, %s144
      %s148 = sphi 0, %s147
      %s164 = sphi 0, %s148
    $region4: #{tpu_custom_call.1} parent=1 // loop_header_branch
      %17 = sbr.rel (%p15) target = $region8
    $region5: #{tpu_custom_call.1} parent=1 // loop_body
      %s19 = ssub.s32 %s14, 1
      %s20 = ssub.s32 %s14, 2
      %s21 = sadd.s32 %s14, 1
      %s22 = ssub.s32 %s14, %s21
      %p23 = scmp.eq.s32.totalorder %s22, 0
      %s25 = sadd.s32 %s24, 1
      %s26 = scalar_select %p23, %s24, %s25
      %p29 = pneg %p23
      %p30 = scmp.eq.s32.totalorder %s14, 1
      %p31 = por %p29, %p30
      %p32 = scmp.ne.s32.totalorder %s24, %s27
      %p33 = scmp.eq.s32.totalorder %s14, 0
      %p34 = por %p32, %p33
      %p35 = scmp.ne.s32.totalorder %s24, %s27
      %p36 = scmp.eq.s32.totalorder %s19, 1
      %p37 = por %p35, %p36
      %p38 = scmp.ne.s32.totalorder %s27, %s28
      %p39 = scmp.eq.s32.totalorder %s19, 0
      %p40 = por %p38, %p39
      %p41 = scmp.ne.s32.totalorder %s27, %s28
      %p42 = scmp.eq.s32.totalorder %s20, 1
      %p43 = por %p41, %p42
      %p45 = scmp.ne.s32.totalorder %s28, %s44
      %p46 = scmp.eq.s32.totalorder %s20, 0
      %p47 = por %p45, %p46
      %s48 = ssub.s32 %s14, %s21
      %p49 = scmp.eq.s32.totalorder %s48, 0
      %s51 = sadd.s32 %s50, 1
      %s52 = scalar_select %p49, %s50, %s51
      %p55 = pneg %p49
      %p56 = scmp.eq.s32.totalorder %s14, 1
      %p57 = por %p55, %p56
      %p58 = scmp.ne.s32.totalorder %s50, %s53
      %p59 = scmp.eq.s32.totalorder %s14, 0
      %p60 = por %p58, %p59
      %p61 = scmp.ne.s32.totalorder %s50, %s53
      %p62 = scmp.eq.s32.totalorder %s19, 1
      %p63 = por %p61, %p62
      %p64 = scmp.ne.s32.totalorder %s53, %s54
      %p65 = scmp.eq.s32.totalorder %s19, 0
      %p66 = por %p64, %p65
      %p67 = scmp.ne.s32.totalorder %s53, %s54
      %p68 = scmp.eq.s32.totalorder %s20, 1
      %p69 = por %p67, %p68
      %p71 = scmp.ne.s32.totalorder %s54, %s70
      %p72 = scmp.eq.s32.totalorder %s20, 0
      %p73 = por %p71, %p72
      %s74 = ssub.s32 %s14, %s21
      %p75 = scmp.eq.s32.totalorder %s74, 0
      %s77 = sadd.s32 %s76, 1
      %s78 = scalar_select %p75, %s76, %s77
      %p81 = pneg %p75
      %p82 = scmp.eq.s32.totalorder %s14, 1
      %p83 = por %p81, %p82
      %p84 = scmp.ne.s32.totalorder %s76, %s79
      %p85 = scmp.eq.s32.totalorder %s14, 0
      %p86 = por %p84, %p85
      %p87 = scmp.ne.s32.totalorder %s76, %s79
      %p88 = scmp.eq.s32.totalorder %s19, 1
      %p89 = por %p87, %p88
      %p90 = scmp.ne.s32.totalorder %s79, %s80
      %p91 = scmp.eq.s32.totalorder %s19, 0
      %p92 = por %p90, %p91
      %p93 = scmp.ne.s32.totalorder %s79, %s80
      %p94 = scmp.eq.s32.totalorder %s20, 1
      %p95 = por %p93, %p94
      %p97 = scmp.ne.s32.totalorder %s80, %s96
      %p98 = scmp.eq.s32.totalorder %s20, 0
      %p99 = por %p97, %p98
      %s101 = sadd.s32 %s100, 1
      %p104 = scmp.eq.s32.totalorder %s14, 1
      %p105 = scmp.ne.s32.totalorder %s100, %s102
      %p106 = scmp.eq.s32.totalorder %s14, 0
      %p107 = por %p105, %p106
      %p108 = scmp.ne.s32.totalorder %s100, %s102
      %p109 = scmp.eq.s32.totalorder %s19, 1
      %p110 = por %p108, %p109
      %p111 = scmp.ne.s32.totalorder %s102, %s103
      %p112 = scmp.eq.s32.totalorder %s19, 0
      %p113 = por %p111, %p112
      %p114 = scmp.ne.s32.totalorder %s102, %s103
      %p115 = scmp.eq.s32.totalorder %s20, 1
      %p116 = por %p114, %p115
      %p118 = scmp.ne.s32.totalorder %s103, %s117
      %p119 = scmp.eq.s32.totalorder %s20, 0
      %p120 = por %p118, %p119
      %s122 = sadd.s32 %s121, 1
      %p125 = scmp.eq.s32.totalorder %s14, 1
      %p126 = scmp.ne.s32.totalorder %s121, %s123
      %p127 = scmp.eq.s32.totalorder %s14, 0
      %p128 = por %p126, %p127
      %p129 = scmp.ne.s32.totalorder %s121, %s123
      %p130 = scmp.eq.s32.totalorder %s19, 1
      %p131 = por %p129, %p130
      %p132 = scmp.ne.s32.totalorder %s123, %s124
      %p133 = scmp.eq.s32.totalorder %s19, 0
      %p134 = por %p132, %p133
      %p135 = scmp.ne.s32.totalorder %s123, %s124
      %p136 = scmp.eq.s32.totalorder %s20, 1
      %p137 = por %p135, %p136
      %p139 = scmp.ne.s32.totalorder %s124, %s138
      %p140 = scmp.eq.s32.totalorder %s20, 0
      %p141 = por %p139, %p140
      %s142 = ssub.s32 %s14, %s21
      %p143 = scmp.eq.s32.totalorder %s142, 0
      %s145 = sadd.s32 %s144, 1
      %s146 = scalar_select %p143, %s144, %s145
      %p149 = pneg %p143
      %p150 = scmp.eq.s32.totalorder %s14, 1
      %p151 = por %p149, %p150
      %p152 = scmp.ne.s32.totalorder %s144, %s147
      %p153 = scmp.eq.s32.totalorder %s14, 0
      %p154 = por %p152, %p153
      %p155 = scmp.ne.s32.totalorder %s144, %s147
      %p156 = scmp.eq.s32.totalorder %s19, 1
      %p157 = por %p155, %p156
      %p158 = scmp.ne.s32.totalorder %s147, %s148
      %p159 = scmp.eq.s32.totalorder %s19, 0
      %p160 = por %p158, %p159
      %p161 = scmp.ne.s32.totalorder %s147, %s148
      %p162 = scmp.eq.s32.totalorder %s20, 1
      %p163 = por %p161, %p162
      %p165 = scmp.ne.s32.totalorder %s148, %s164
      %p166 = scmp.eq.s32.totalorder %s20, 0
      %p167 = por %p165, %p166
      %p168 = scmp.le.s32.totalorder 1, %s14
      %p169 = scmp.lt.s32.totalorder %s14, 3
      %p170 = pnand %p168, %p169
      %p171 = pneg %p170
      // Predicated region
      $region9: #{tpu_custom_call.1} parent=5 // pred_check
        _
      $region10: #{tpu_custom_call.1} parent=5 // pred_check_branch
        %173 = sbr.rel (%p170) target = $region12
      $region11: #{tpu_custom_call.1} parent=5 // pred_region
        %s174 = ssub.s32 %s14, 1
        // Predicated region
        $region13: #{tpu_custom_call.1} parent=11 // pred_check
          %p175 = pneg %p113
        $region14: #{tpu_custom_call.1} parent=11 // pred_check_branch
          %177 = sbr.rel (%p175) target = $region16
        $region15: #{tpu_custom_call.1} parent=11 // pred_region
          _
        $region16: #{tpu_custom_call.1} parent=11 // pred_fallthru
          _
        // Predicated region
        $region17: #{tpu_custom_call.1} parent=11 // pred_check
          %p178 = pneg %p134
        $region18: #{tpu_custom_call.1} parent=11 // pred_check_branch
          %180 = sbr.rel (%p178) target = $region20
        $region19: #{tpu_custom_call.1} parent=11 // pred_region
          _
        $region20: #{tpu_custom_call.1} parent=11 // pred_fallthru
          _
      $region12: #{tpu_custom_call.1} parent=5 // pred_fallthru
        _
      %p181 = scmp.lt.s32.totalorder %s14, 2
      // Predicated region
      $region21: #{tpu_custom_call.1} parent=5 // pred_check
        %p182 = pneg %p181
      $region22: #{tpu_custom_call.1} parent=5 // pred_check_branch
        %184 = sbr.rel (%p182) target = $region24
      $region23: #{tpu_custom_call.1} parent=5 // pred_region
        // Predicated region
        $region25: #{tpu_custom_call.1} parent=23 // pred_check
          %p185 = pneg %p34
        $region26: #{tpu_custom_call.1} parent=23 // pred_check_branch
          %187 = sbr.rel (%p185) target = $region28
        $region27: #{tpu_custom_call.1} parent=23 // pred_region
          %s188 = smul.u32 2, %s14
          %p189 = scmp.lt.s32.totalorder %s188, 3
          %s190 = scalar_select %p189, %s188, 3
          %s191 = smul.addr %s190, 4
          %s192 = scalar_lea.vmem %s0, %s191
          %s193 = smul.u32 2, %s14
        $region28: #{tpu_custom_call.1} parent=23 // pred_fallthru
          _
        // Predicated region
        $region29: #{tpu_custom_call.1} parent=23 // pred_check
          %p194 = pneg %p60
        $region30: #{tpu_custom_call.1} parent=23 // pred_check_branch
          %196 = sbr.rel (%p194) target = $region32
        $region31: #{tpu_custom_call.1} parent=23 // pred_region
          %s197 = smul.u32 2, %s14
          %p198 = scmp.lt.s32.totalorder %s197, 3
          %s199 = scalar_select %p198, %s197, 3
          %s200 = smul.addr %s199, 4
          %s201 = smul.addr %s200, 4
          %s202 = scalar_lea.vmem %s1, %s201
          %s203 = smul.u32 2, %s14
        $region32: #{tpu_custom_call.1} parent=23 // pred_fallthru
          _
        // Predicated region
        $region33: #{tpu_custom_call.1} parent=23 // pred_check
          %p204 = pneg %p86
        $region34: #{tpu_custom_call.1} parent=23 // pred_check_branch
          %206 = sbr.rel (%p204) target = $region36
        $region35: #{tpu_custom_call.1} parent=23 // pred_region
          %s207 = smul.u32 2, %s14
          %p208 = scmp.lt.s32.totalorder %s207, 3
          %s209 = scalar_select %p208, %s207, 3
          %s210 = smul.addr %s209, 4
          %s211 = scalar_lea.vmem %s2, %s210
          %s212 = smul.u32 2, %s14
        $region36: #{tpu_custom_call.1} parent=23 // pred_fallthru
          _
      $region24: #{tpu_custom_call.1} parent=5 // pred_fallthru
        _
      %p213 = scmp.le.s32.totalorder 1, %s14
      %p214 = scmp.lt.s32.totalorder %s14, 3
      %p215 = pnand %p213, %p214
      %p216 = pneg %p215
      // Predicated region
      $region37: #{tpu_custom_call.1} parent=5 // pred_check
        _
      $region38: #{tpu_custom_call.1} parent=5 // pred_check_branch
        %218 = sbr.rel (%p215) target = $region40
      $region39: #{tpu_custom_call.1} parent=5 // pred_region
        %s219 = ssub.s32 %s14, 1
        %s220 = smul.u32 2, %s19
        %p221 = scmp.lt.s32.totalorder %s220, 3
        %s222 = scalar_select %p221, %s220, 3
        %s223 = smul.addr %s222, 4
        %s224 = scalar_lea.vmem %s0, %s223
        %p225 = pneg %p40
        %p226 = pneg %p37
        %s227 = smul.u32 2, %s19
        %p228 = scmp.lt.s32.totalorder %s227, 3
        %s229 = scalar_select %p228, %s227, 3
        %s230 = smul.addr %s229, 4
        %s231 = smul.addr %s230, 4
        %s232 = scalar_lea.vmem %s1, %s231
        %p233 = pneg %p66
        %p234 = pneg %p63
        %s235 = smul.u32 2, %s19
        %p236 = scmp.lt.s32.totalorder %s235, 3
        %s237 = scalar_select %p236, %s235, 3
        %s238 = smul.addr %s237, 4
        %s239 = scalar_lea.vmem %s2, %s238
        %p240 = pneg %p92
        %p241 = pneg %p89
        %p242 = pneg %p113
        %p243 = pneg %p110
        %p244 = pneg %p134
        %p245 = pneg %p131
        %p246 = pneg %p160
        %p247 = pneg %p157
        %s248 = sand.u32 %s147, 1
        %s249 = scalar_lea.sflag [#allocation3], %s248
        %s250 = sand.u32 %s147, 1
        %s251 = smul.addr %s250, 16
        %s252 = scalar_lea.vmem [#allocation2], %s251
        %s253 = smul.u32 2, %s19
        %p254 = scmp.lt.s32.totalorder %s253, 3
        %s255 = scalar_select %p254, %s253, 3
        %s256 = smul.addr %s255, 4
        %s257 = scalar_lea.vmem %s0, %s256
        %s258 = smul.u32 2, %s19
        %s259 = smul.u32 2, %s19
        %p260 = scmp.lt.s32.totalorder %s259, 3
        %s261 = scalar_select %p260, %s259, 3
        %s262 = smul.addr %s261, 4
        %s263 = smul.addr %s262, 4
        %s264 = scalar_lea.vmem %s1, %s263
        %s265 = smul.u32 2, %s19
        %s266 = smul.u32 2, %s19
        %p267 = scmp.lt.s32.totalorder %s266, 3
        %s268 = scalar_select %p267, %s266, 3
        %s269 = smul.addr %s268, 4
        %s270 = scalar_lea.vmem %s2, %s269
        %s271 = smul.u32 2, %s19
        %s272 = smul.u32 2, %s19
        %v274 = vld [vmem:[%s257] sm:$0xf]
        %v275 = vld [vmem:[%s257 + $0x4] sm:$0xf]
        %v276 = vld [vmem:[%s264] sm:$0xf]
        %v277 = vld [vmem:[%s264 + $0x4] sm:$0xf]
        %v278 = vld [vmem:[%s264 + $0x8] sm:$0xf]
        %v279 = vld [vmem:[%s264 + $0xc] sm:$0xf]
        %v280 = vld [vmem:[%s264 + $0x10] sm:$0xf]
        %v281 = vld [vmem:[%s264 + $0x14] sm:$0xf]
        %v282 = vld [vmem:[%s264 + $0x18] sm:$0xf]
        %v283 = vld [vmem:[%s264 + $0x1c] sm:$0xf]
        %v284 = vld [vmem:[%s270] sm:$0xf]
        %v285 = vld [vmem:[%s270 + $0x4] sm:$0xf]
        %v290 = vunpack.c.l.b16 %v276
        %v291 = vunpack.c.l.b16 %v277
        %v292 = vunpack.c.l.b16 %v278
        %v293 = vunpack.c.l.b16 %v279
        %v294 = vpack.c.b16 %v291, %v290
        %v295 = vpack.c.b16 %v293, %v292
        %vm298 = vcmask 261120
        %v300 = vsel %vm298, %v274, 0
        %302 = vmatprep.subr.bf16.mxu0 0
        %303 = vmatpush1.bf16.msra.mxu0 %v294
        %304 = vmatprep.subr.bf16.mxu0 0
        %305 = vmatpush1.bf16.msra.mxu0 %v295
        %306 = vmatprep.subr.bf16.mxu0 0
        %307 = vmatpush1.bf16.msra.mxu0 0
        %308 = vmatprep.subr.bf16.mxu0 0
        %309 = vmatpush1.bf16.msra.mxu0 0
        %310 = vmatprep.subr.bf16.mxu0 0
        %311 = vmatpush1.bf16.msra.mxu0 0
        %312 = vmatprep.subr.bf16.mxu0 0
        %313 = vmatpush1.bf16.msra.mxu0 0
        %314 = vmatprep.subr.bf16.mxu0 0
        %315 = vmatpush1.bf16.msra.mxu0 0
        %316 = vmatprep.subr.bf16.mxu0 0
        %317 = vmatpush1.bf16.msra.mxu0 0
        %318 = vmatprep.subr.bf16.mxu0 0
        %319 = vmatpush1.bf16.msra.mxu0 0
        %320 = vmatprep.subr.bf16.mxu0 0
        %321 = vmatpush1.bf16.msra.mxu0 0
        %322 = vmatprep.subr.bf16.mxu0 0
        %323 = vmatpush1.bf16.msra.mxu0 0
        %324 = vmatprep.subr.bf16.mxu0 0
        %325 = vmatpush1.bf16.msra.mxu0 0
        %326 = vmatprep.subr.bf16.mxu0 0
        %327 = vmatpush1.bf16.msra.mxu0 0
        %328 = vmatprep.subr.bf16.mxu0 0
        %329 = vmatpush1.bf16.msra.mxu0 0
        %330 = vmatprep.subr.bf16.mxu0 0
        %331 = vmatpush1.bf16.msra.mxu0 0
        %332 = vmatprep.subr.bf16.mxu0 0
        %333 = vmatpush1.bf16.msra.mxu0 0
        %334 = vmatprep.mubr.bf16.mxu0 0
        %335 = vmatmul.mubr.bf16.gmra.mrb[0].mxu0 %v300
        %v336 = vpop.f32.mrb[0].mxu0
        %v337 = vadd.f32 0.0, %v336
        %v338 = vpop.f32.mrb[0].mxu0
        %v339 = vpop.f32.mrb[0].mxu0
        %v340 = vpop.f32.mrb[0].mxu0
        %341 = vdwg.mxu0
        %v346 = vunpack.c.l.b16 %v280
        %v347 = vunpack.c.l.b16 %v281
        %v348 = vunpack.c.l.b16 %v282
        %v349 = vunpack.c.l.b16 %v283
        %v350 = vpack.c.b16 %v347, %v346
        %v351 = vpack.c.b16 %v349, %v348
        %v355 = vsel %vm298, %v275, 0
        %357 = vmatprep.subr.bf16.mxu0 0
        %358 = vmatpush1.bf16.msra.mxu0 %v350
        %359 = vmatprep.subr.bf16.mxu0 0
        %360 = vmatpush1.bf16.msra.mxu0 %v351
        %361 = vmatprep.subr.bf16.mxu0 0
        %362 = vmatpush1.bf16.msra.mxu0 0
        %363 = vmatprep.subr.bf16.mxu0 0
        %364 = vmatpush1.bf16.msra.mxu0 0
        %365 = vmatprep.subr.bf16.mxu0 0
        %366 = vmatpush1.bf16.msra.mxu0 0
        %367 = vmatprep.subr.bf16.mxu0 0
        %368 = vmatpush1.bf16.msra.mxu0 0
        %369 = vmatprep.subr.bf16.mxu0 0
        %370 = vmatpush1.bf16.msra.mxu0 0
        %371 = vmatprep.subr.bf16.mxu0 0
        %372 = vmatpush1.bf16.msra.mxu0 0
        %373 = vmatprep.subr.bf16.mxu0 0
        %374 = vmatpush1.bf16.msra.mxu0 0
        %375 = vmatprep.subr.bf16.mxu0 0
        %376 = vmatpush1.bf16.msra.mxu0 0
        %377 = vmatprep.subr.bf16.mxu0 0
        %378 = vmatpush1.bf16.msra.mxu0 0
        %379 = vmatprep.subr.bf16.mxu0 0
        %380 = vmatpush1.bf16.msra.mxu0 0
        %381 = vmatprep.subr.bf16.mxu0 0
        %382 = vmatpush1.bf16.msra.mxu0 0
        %383 = vmatprep.subr.bf16.mxu0 0
        %384 = vmatpush1.bf16.msra.mxu0 0
        %385 = vmatprep.subr.bf16.mxu0 0
        %386 = vmatpush1.bf16.msra.mxu0 0
        %387 = vmatprep.subr.bf16.mxu0 0
        %388 = vmatpush1.bf16.msra.mxu0 0
        %389 = vmatprep.mubr.bf16.mxu0 0
        %390 = vmatmul.mubr.bf16.gmra.mrb[0].mxu0 %v355
        %v391 = vpop.f32.mrb[0].mxu0
        %v392 = vadd.f32 0.0, %v391
        %v393 = vpop.f32.mrb[0].mxu0
        %v394 = vpop.f32.mrb[0].mxu0
        %v395 = vpop.f32.mrb[0].mxu0
        %396 = vdwg.mxu0
        %vm397 = vcmask 64512
        %v398 = vsel %vm397, %v337, -inf
        %399 = vmax.xlane.f32.xlu0 %v398
        %v400 = vpop.xlane.xlu0 %399
        %v401 = vsel %vm397, %v392, -inf
        %402 = vmax.xlane.f32.xlu0 %v401
        %v403 = vpop.xlane.xlu0 %402
        %v404 = vsub.f32 %v337, %v400
        %v405 = vsub.f32 %v392, %v403
        %v406 = vmul.f32 %v404, 1.442695
        %v407 = vpow.pop %v406
        %v408 = vmul.f32 %v405, 1.442695
        %v409 = vpow.pop %v408
        %v410 = vsel %vm397, %v407, 0.0
        %411 = vadd.xlane.f32.xlu0 %v410
        %v412 = vpop.xlane.xlu0 %411
        %v413 = vsel %vm397, %v409, 0.0
        %414 = vadd.xlane.f32.xlu0 %v413
        %v415 = vpop.xlane.xlu0 %414
        %v416 = vpack.c.bf16 %v407, %v407
        %v417 = vpack.c.bf16 %v409, %v409
        %v419 = vsel %vm397, %v416, 0
        %vm421 = vcmask 1043456
        %v423 = vsel %vm421, %v284, 0
        %425 = vmatprep.subr.bf16.mxu0 0
        %426 = vmatpush1.bf16.msra.mxu0 %v423
        %427 = vmatprep.subr.bf16.mxu0 0
        %428 = vmatpush1.bf16.msra.mxu0 0
        %429 = vmatprep.subr.bf16.mxu0 0
        %430 = vmatpush1.bf16.msra.mxu0 0
        %431 = vmatprep.subr.bf16.mxu0 0
        %432 = vmatpush1.bf16.msra.mxu0 0
        %433 = vmatprep.subr.bf16.mxu0 0
        %434 = vmatpush1.bf16.msra.mxu0 0
        %435 = vmatprep.subr.bf16.mxu0 0
        %436 = vmatpush1.bf16.msra.mxu0 0
        %437 = vmatprep.subr.bf16.mxu0 0
        %438 = vmatpush1.bf16.msra.mxu0 0
        %439 = vmatprep.subr.bf16.mxu0 0
        %440 = vmatpush1.bf16.msra.mxu0 0
        %441 = vmatprep.subr.bf16.mxu0 0
        %442 = vmatpush1.bf16.msra.mxu0 0
        %443 = vmatprep.subr.bf16.mxu0 0
        %444 = vmatpush1.bf16.msra.mxu0 0
        %445 = vmatprep.subr.bf16.mxu0 0
        %446 = vmatpush1.bf16.msra.mxu0 0
        %447 = vmatprep.subr.bf16.mxu0 0
        %448 = vmatpush1.bf16.msra.mxu0 0
        %449 = vmatprep.subr.bf16.mxu0 0
        %450 = vmatpush1.bf16.msra.mxu0 0
        %451 = vmatprep.subr.bf16.mxu0 0
        %452 = vmatpush1.bf16.msra.mxu0 0
        %453 = vmatprep.subr.bf16.mxu0 0
        %454 = vmatpush1.bf16.msra.mxu0 0
        %455 = vmatprep.subr.bf16.mxu0 0
        %456 = vmatpush1.bf16.msra.mxu0 0
        %457 = vmatprep.mubr.bf16.mxu0 0
        %458 = vmatmul.mubr.bf16.gmra.mrb[0].mxu0 %v419
        %v459 = vpop.f32.mrb[0].mxu0
        %v460 = vadd.f32 0.0, %v459
        %v461 = vpop.f32.mrb[0].mxu0
        %v462 = vpop.f32.mrb[0].mxu0
        %v463 = vpop.f32.mrb[0].mxu0
        %464 = vdwg.mxu0
        %v466 = vsel %vm397, %v417, 0
        %v469 = vsel %vm421, %v285, 0
        %471 = vmatprep.subr.bf16.mxu0 0
        %472 = vmatpush1.bf16.msra.mxu0 %v469
        %473 = vmatprep.subr.bf16.mxu0 0
        %474 = vmatpush1.bf16.msra.mxu0 0
        %475 = vmatprep.subr.bf16.mxu0 0
        %476 = vmatpush1.bf16.msra.mxu0 0
        %477 = vmatprep.subr.bf16.mxu0 0
        %478 = vmatpush1.bf16.msra.mxu0 0
        %479 = vmatprep.subr.bf16.mxu0 0
        %480 = vmatpush1.bf16.msra.mxu0 0
        %481 = vmatprep.subr.bf16.mxu0 0
        %482 = vmatpush1.bf16.msra.mxu0 0
        %483 = vmatprep.subr.bf16.mxu0 0
        %484 = vmatpush1.bf16.msra.mxu0 0
        %485 = vmatprep.subr.bf16.mxu0 0
        %486 = vmatpush1.bf16.msra.mxu0 0
        %487 = vmatprep.subr.bf16.mxu0 0
        %488 = vmatpush1.bf16.msra.mxu0 0
        %489 = vmatprep.subr.bf16.mxu0 0
        %490 = vmatpush1.bf16.msra.mxu0 0
        %491 = vmatprep.subr.bf16.mxu0 0
        %492 = vmatpush1.bf16.msra.mxu0 0
        %493 = vmatprep.subr.bf16.mxu0 0
        %494 = vmatpush1.bf16.msra.mxu0 0
        %495 = vmatprep.subr.bf16.mxu0 0
        %496 = vmatpush1.bf16.msra.mxu0 0
        %497 = vmatprep.subr.bf16.mxu0 0
        %498 = vmatpush1.bf16.msra.mxu0 0
        %499 = vmatprep.subr.bf16.mxu0 0
        %500 = vmatpush1.bf16.msra.mxu0 0
        %501 = vmatprep.subr.bf16.mxu0 0
        %502 = vmatpush1.bf16.msra.mxu0 0
        %503 = vmatprep.mubr.bf16.mxu0 0
        %504 = vmatmul.mubr.bf16.gmra.mrb[0].mxu0 %v466
        %v505 = vpop.f32.mrb[0].mxu0
        %v506 = vadd.f32 0.0, %v505
        %v507 = vpop.f32.mrb[0].mxu0
        %v508 = vpop.f32.mrb[0].mxu0
        %v509 = vpop.f32.mrb[0].mxu0
        %510 = vdwg.mxu0
        %v511 = vrcp.pop %v412
        %v512 = vrcp.pop %v415
        %v513 = vmul.f32 %v460, %v511
        %v514 = vmul.f32 %v506, %v512
        %v515 = vpack.c.bf16 %v514, %v513
        %v516 = vld [vmem:[%s3] sm:$0xf]
        %v517 = vld [vmem:[%s3 + $0x4] sm:$0xf]
        %v518 = vld [vmem:[%s3 + $0x8] sm:$0xf]
        %v519 = vld [vmem:[%s3 + $0xc] sm:$0xf]
        %v520 = vld [vmem:[%s4] sm:$0x1]
        %v522 = vlaneseq
        %v523 = vshrl.u32 %v522, 7
        %v524 = vsub.s32 0, %v523
        %v525 = vrot.slane %v520, %v524
        %v531 = vunpack.c.l.b16 %v516
        %v532 = vunpack.c.l.b16 %v517
        %v533 = vunpack.c.l.b16 %v518
        %v534 = vunpack.c.l.b16 %v519
        %v535 = vpack.c.b16 %v532, %v531
        %v536 = vpack.c.b16 %v534, %v533
        %v540 = vsel %vm298, %v515, 0
        %542 = vmatprep.subr.bf16.mxu0 0
        %543 = vmatpush1.bf16.msra.mxu0 %v535
        %544 = vmatprep.subr.bf16.mxu0 0
        %545 = vmatpush1.bf16.msra.mxu0 %v536
        %546 = vmatprep.subr.bf16.mxu0 0
        %547 = vmatpush1.bf16.msra.mxu0 0
        %548 = vmatprep.subr.bf16.mxu0 0
        %549 = vmatpush1.bf16.msra.mxu0 0
        %550 = vmatprep.subr.bf16.mxu0 0
        %551 = vmatpush1.bf16.msra.mxu0 0
        %552 = vmatprep.subr.bf16.mxu0 0
        %553 = vmatpush1.bf16.msra.mxu0 0
        %554 = vmatprep.subr.bf16.mxu0 0
        %555 = vmatpush1.bf16.msra.mxu0 0
        %556 = vmatprep.subr.bf16.mxu0 0
        %557 = vmatpush1.bf16.msra.mxu0 0
        %558 = vmatprep.subr.bf16.mxu0 0
        %559 = vmatpush1.bf16.msra.mxu0 0
        %560 = vmatprep.subr.bf16.mxu0 0
        %561 = vmatpush1.bf16.msra.mxu0 0
        %562 = vmatprep.subr.bf16.mxu0 0
        %563 = vmatpush1.bf16.msra.mxu0 0
        %564 = vmatprep.subr.bf16.mxu0 0
        %565 = vmatpush1.bf16.msra.mxu0 0
        %566 = vmatprep.subr.bf16.mxu0 0
        %567 = vmatpush1.bf16.msra.mxu0 0
        %568 = vmatprep.subr.bf16.mxu0 0
        %569 = vmatpush1.bf16.msra.mxu0 0
        %570 = vmatprep.subr.bf16.mxu0 0
        %571 = vmatpush1.bf16.msra.mxu0 0
        %572 = vmatprep.subr.bf16.mxu0 0
        %573 = vmatpush1.bf16.msra.mxu0 0
        %574 = vmatprep.mubr.bf16.mxu0 0
        %575 = vmatmul.mubr.bf16.gmra.mrb[0].mxu0 %v540
        %v576 = vpop.f32.mrb[0].mxu0
        %v577 = vadd.f32 %v525, %v576
        %v578 = vpop.f32.mrb[0].mxu0
        %v579 = vpop.f32.mrb[0].mxu0
        %v580 = vadd.f32 %v525, %v579
        %v581 = vpop.f32.mrb[0].mxu0
        %582 = vdwg.mxu0
        %583 = vst.msk [vmem:[%s252] sm:$0xff] %vm298, %v577
        %584 = vst.msk [vmem:[%s252 + $0x8] sm:$0xff] %vm298, %v580
        %s585 = sand.u32 %s147, 1
        %s586 = scalar_lea.sflag [#allocation3], %s585
        %s587 = sand.u32 %s147, 1
        %s588 = smul.addr %s587, 16
        %s589 = scalar_lea.vmem [#allocation2], %s588
        // Predicated region
        $region41: #{tpu_custom_call.1} parent=39 // pred_check
          %p590 = pneg %p157
        $region42: #{tpu_custom_call.1} parent=39 // pred_check_branch
          %592 = sbr.rel (%p590) target = $region44
        $region43: #{tpu_custom_call.1} parent=39 // pred_region
          %s593 = smul.u32 2, %s19
          %s595 = ssub.s32 256, 256
          %596 = vsyncadd %s586, %s595
          %s597 = smul.addr %s593, 128
          %s598 = scalar_lea.hbm %s5, %s597
          %s599 = sshll.u32 %s589, 4
          %s600 = int_to_ptr.vmem [resolvable:$true] %s599
          %605 = dma.vmem_to_hbm [thread:$0]  %s600, 256, %s598, %s586, 128, 128, 8
        $region44: #{tpu_custom_call.1} parent=39 // pred_fallthru
          _
      $region40: #{tpu_custom_call.1} parent=5 // pred_fallthru
        _
      %p606 = scmp.le.s32.totalorder 2, %s14
      // Predicated region
      $region45: #{tpu_custom_call.1} parent=5 // pred_check
        %p607 = pneg %p606
      $region46: #{tpu_custom_call.1} parent=5 // pred_check_branch
        %609 = sbr.rel (%p607) target = $region48
      $region47: #{tpu_custom_call.1} parent=5 // pred_region
        %s610 = ssub.s32 %s14, 2
        // Predicated region
        $region49: #{tpu_custom_call.1} parent=47 // pred_check
          %p611 = pneg %p163
        $region50: #{tpu_custom_call.1} parent=47 // pred_check_branch
          %613 = sbr.rel (%p611) target = $region52
        $region51: #{tpu_custom_call.1} parent=47 // pred_region
          %s614 = sand.u32 %s148, 1
          %s615 = scalar_lea.sflag [#allocation3], %s614
          %s616 = sand.u32 %s148, 1
          %s617 = smul.addr %s616, 16
          %s618 = scalar_lea.vmem [#allocation2], %s617
          %619 = dma.done %s615, 256
        $region52: #{tpu_custom_call.1} parent=47 // pred_fallthru
          _
      $region48: #{tpu_custom_call.1} parent=5 // pred_fallthru
        _
    $region6: #{tpu_custom_call.1} parent=1 // loop_footer
      %s18 = sadd.s32 1, %s14
    $region7: #{tpu_custom_call.1} parent=1 // loop_footer_branch
      %13 = sbr.rel target = $region3
    $region8: #{tpu_custom_call.1} parent=1 // loop_exit
      _
    %620 = vsyncpa [#allocation3], 1
    %s621 = scalar_lea.sflag [#allocation3], 1
    %622 = vsyncpa %s621, 1

</llo_original>
